<compile_context>
chip_gen: v7x
topology: tpu7x:2x2x1
jax: 0.10.0
libtpu: 0.0.40
codegen_flags: <defaults>
</compile_context>

<pallas_src>
import jax
import jax.numpy as jnp
from jax.experimental import pallas as pl
from jax.experimental.pallas import tpu as pltpu


def _round_up(a, b):
    return (a + b - 1) // b * b


def _make_kernel(r, n_rows, needs_mask):
    r = float(r)

    def kernel(x_ref, lbl_ref, hi_ref, cn_ref, out_ref):
        tn, c_pad = x_ref.shape
        n_proto = cn_ref.shape[0]

        x = x_ref[...].astype(jnp.float32)          # [TN, C_pad] (-1e30 pad cols)
        lbl = lbl_ref[...]                          # [TN, 1] int32
        hi = hi_ref[...].astype(jnp.float32)        # [TN, D_pad]

        if needs_mask:
            # Ragged tail tile: rows >= N hold unspecified data.  Zero them so
            # every per-row quantity is finite; alpha is additionally masked
            # below so pad rows contribute exactly 0 even if r <= 0.
            row = pl.program_id(0) * tn + jax.lax.broadcasted_iota(
                jnp.int32, (tn, 1), 0)
            valid = row < n_rows
            x = jnp.where(valid, x, 0.0)
            hi = jnp.where(valid, hi, 0.0)
            lbl = jnp.where(valid, lbl, -1)

        # one-hot labels built in-kernel (pad class columns never match)
        cls = jax.lax.broadcasted_iota(jnp.int32, (tn, c_pad), 1)
        y1h = (cls == lbl).astype(jnp.float32)      # [TN, C_pad]

        # feature normalization: per-row reciprocal, broadcast multiply
        norm = jnp.sqrt(jnp.sum(hi * hi, axis=1, keepdims=True))
        inv = 1.0 / (norm + 1e-8)                   # [TN, 1]
        hi_n = hi * inv

        # prototype similarity: L lane-aligned bf16xbf16->f32 MXU dots with a
        # running max (caps the f32 intermediate at ~2*TN*C_pad floats),
        # then abs (PyTorch order: max first, then abs).
        hi_mxu = hi_n.astype(cn_ref.dtype)          # only the MXU operand narrows
        best = jnp.dot(hi_mxu, cn_ref[0], preferred_element_type=jnp.float32)
        for l in range(1, n_proto):
            best = jnp.maximum(
                best,
                jnp.dot(hi_mxu, cn_ref[l], preferred_element_type=jnp.float32))
        y_star = jnp.abs(best)                      # [TN, C_pad], 0 on pad cols

        # log-softmax of logits (f32); -1e30 pad columns underflow exp to 0
        xm = jnp.max(x, axis=1, keepdims=True)
        lse = xm + jnp.log(jnp.sum(jnp.exp(x - xm), axis=1, keepdims=True))
        logp = x - lse

        ce_hard = -jnp.sum(y1h * logp, axis=1, keepdims=True)     # [TN, 1]
        ce_soft = -jnp.sum(y_star * logp, axis=1, keepdims=True)  # [TN, 1]

        mmax = jnp.max(y_star * (1.0 - y1h), axis=1, keepdims=True)
        m = jnp.maximum(mmax - r, 0.0)
        alpha = jnp.minimum(2.0 * (1.0 - 1.0 / (m + 1.0)), 1.0)   # [TN, 1]

        if needs_mask:
            alpha = jnp.where(valid, alpha, 0.0)

        # TODO(synk): PyTorch prints alpha.min/max/mean on host; omitted
        # (no effect on the returned loss).

        s_hard = jnp.sum(ce_hard, axis=0, keepdims=True)   # (1, 1)
        s_soft = jnp.sum(ce_soft, axis=0, keepdims=True)
        s_alpha = jnp.sum(alpha, axis=0, keepdims=True)

        # pack the three partial sums into one lane-dense (1,1,128) store
        lane = jax.lax.broadcasted_iota(jnp.int32, (1, 128), 1)
        packed = jnp.where(lane == 0, s_hard, 0.0)
        packed = jnp.where(lane == 1, s_soft, packed)
        packed = jnp.where(lane == 2, s_alpha, packed)
        out_ref[...] = packed.reshape(1, 1, 128)

    return kernel


def prepare_cn(cn, dtype=jnp.bfloat16):
    """set_cn analogue: [C, L, D] prototype bank -> bf16 [L, D_pad, C_pad] slab.

    Zero-padding D and C to multiples of 128 keeps every MXU operand and every
    per-L slice lane-dense; zero prototype columns make y_star exactly 0 for
    padded classes.  Do this ONCE when the bank is set, not per forward call.
    """
    c, l, d = cn.shape
    d_pad = _round_up(d, 128)
    c_pad = _round_up(c, 128)
    slab = jnp.transpose(cn, (1, 2, 0))                     # [L, D, C]
    slab = jnp.pad(slab, ((0, 0), (0, d_pad - d), (0, c_pad - c)))
    return slab.astype(dtype)                               # [L, D_pad, C_pad]


def _choose_tile_n(n, d_pad, c_pad, n_proto, x_bytes, hi_bytes, cn_bytes):
    """Generation-aware tile size + vmem limit.

    Accounts for the double-buffered resident prototype slab and the f32
    compute temporaries, not just the row streams.
    """
    try:
        cap = int(getattr(pltpu.get_tpu_info(), "vmem_capacity_bytes", 0))
    except Exception:
        cap = 0
    if cap <= 0:
        cap = 64 * 1024 * 1024          # conservative (v7x-sized) fallback

    if cap >= 100 * 1024 * 1024:        # v5e / v6e class: 128 MiB physical VMEM
        vmem_limit = 96 * 1024 * 1024
        budget = 40 * 1024 * 1024
        two_tc = False
    else:                               # v7x class: 64 MiB physical VMEM
        vmem_limit = min(48 * 1024 * 1024, cap * 3 // 4)
        budget = 18 * 1024 * 1024
        two_tc = True

    # Resident slab is double-buffered by the BlockSpec pipeline even though
    # its block index never changes; count it against the budget.
    slab_bytes = 2 * n_proto * d_pad * c_pad * cn_bytes
    avail = max(budget - slab_bytes, 2 * 1024 * 1024)

    per_row = (2 * c_pad * x_bytes            # logits tile (double buffered)
               + 2 * d_pad * hi_bytes         # feature tile (double buffered)
               + 2 * 128 * 4                  # [TN,1] int32 label tile pads to 128 lanes
               + (2 * d_pad + 8 * c_pad) * 4) # f32 compute temporaries (hi_n, sim, logp, masks)

    tn = avail // per_row
    tn = max(8, min(1024, (tn // 8) * 8))
    tn = min(tn, _round_up(n, 8))
    if two_tc and n >= 16:
        # ensure >= 2 grid steps so ("parallel",) can shard across both TCs
        tn = min(tn, _round_up((n + 1) // 2, 8))
    return tn, vmem_limit


def cns_losst_forward(x, y, hi, cn_slab, r=0.01):
    """JAX/Pallas equivalent of CNSLosst(classs, r, loss='cross_entropy').forward(x, y, hi).

    x       : [N, C] float logits (f32 or bf16)
    y       : [N]    integer class labels
    hi      : [N, D] or [N, c, h, w] features
    cn_slab : [L, D_pad, C_pad] prototype slab from prepare_cn() (set_cn analogue)
    """
    if hi.ndim == 4:
        hi = hi.reshape(hi.shape[0], -1)                 # hi.view(N, -1)
    n, c = x.shape
    d = hi.shape[1]
    n_proto, d_pad, c_pad = cn_slab.shape
    assert d <= d_pad and c <= c_pad
    assert d_pad % 128 == 0 and c_pad % 128 == 0

    # Class padding with a large FINITE negative (not -inf) so 0 * logp on the
    # padded columns stays 0 instead of NaN.  Feature padding with zeros.
    if c_pad > c:
        x = jnp.pad(x, ((0, 0), (0, c_pad - c)), constant_values=-1e30)
    if d_pad > d:
        hi = jnp.pad(hi, ((0, 0), (0, d_pad - d)))
    lbl = y.astype(jnp.int32).reshape(n, 1)

    tn, vmem_limit = _choose_tile_n(n, d_pad, c_pad, n_proto,
                                    x.dtype.itemsize, hi.dtype.itemsize,
                                    cn_slab.dtype.itemsize)
    grid_n = pl.cdiv(n, tn)
    needs_mask = (n % tn) != 0          # ragged batch handled in-kernel (no jnp.pad of hi/x)

    partial = pl.pallas_call(
        _make_kernel(r, n, needs_mask),
        grid=(grid_n,),
        in_specs=[
            pl.BlockSpec((tn, c_pad), lambda i: (i, 0)),            # logits tile
            pl.BlockSpec((tn, 1), lambda i: (i, 0)),                # int32 labels tile
            pl.BlockSpec((tn, d_pad), lambda i: (i, 0)),            # feature tile
            pl.BlockSpec((n_proto, d_pad, c_pad), lambda i: (0, 0, 0)),  # bf16 slab (resident)
        ],
        out_specs=pl.BlockSpec((1, 1, 128), lambda i: (i, 0, 0)),
        out_shape=jax.ShapeDtypeStruct((grid_n, 1, 128), jnp.float32),
        compiler_params=pltpu.CompilerParams(
            dimension_semantics=("parallel",),   # independent tiles -> megacore-shardable
            vmem_limit_bytes=vmem_limit,
        ),
    )(x, lbl, hi, cn_slab)

    sums = jnp.sum(partial, axis=0)              # (1, 128); lanes 0..2 used
    inv_n = 1.0 / n
    ce = sums[0, 0] * inv_n
    cn_loss = sums[0, 1] * inv_n
    alpha_mean = sums[0, 2] * inv_n
    # mean_n((1-a_n)*ce + a_n*cn) == (1 - mean(a))*ce + mean(a)*cn  (ce, cn scalars)
    return (1.0 - alpha_mean) * ce + alpha_mean * cn_loss


if __name__ == "__main__":
    key = jax.random.PRNGKey(0)
    k1, k2, k3, k4 = jax.random.split(key, 4)

    N, C, L = 8, 10, 4            # batch, classes, prototypes per class
    ch, h, w = 2, 8, 8            # hi is 4-D; flattened to D = 128 in the wrapper
    D = ch * h * w

    x = jax.random.normal(k1, (N, C), dtype=jnp.float32)          # logits
    y = jax.random.randint(k2, (N,), 0, C, dtype=jnp.int32)       # labels
    hi = jax.random.normal(k3, (N, ch, h, w), dtype=jnp.float32)  # features
    cn = jax.random.normal(k4, (C, L, D), dtype=jnp.float32)      # prototype bank

    cn_slab = prepare_cn(cn)      # set_cn analogue: reshaped/padded/bf16 once
    loss = cns_losst_forward(x, y, hi, cn_slab, r=0.01)
    loss = jax.block_until_ready(loss)
    assert bool(jnp.isfinite(loss))
    print("KERNEL_OK")
</pallas_src>

<mosaic_0001>
module attributes {stable_mosaic.version = 11 : i64} {
  func.func @kernel(%arg0: i32, %arg1: memref<8x128xf32, #tpu.memory_space<vmem>>, %arg2: memref<8x1xi32, #tpu.memory_space<vmem>>, %arg3: memref<8x128xf32, #tpu.memory_space<vmem>>, %arg4: memref<4x128x128xbf16, #tpu.memory_space<vmem>>, %arg5: memref<1x1x128xf32, #tpu.memory_space<vmem>>) attributes {dimension_semantics = [#tpu.dimension_semantics<parallel>], iteration_bounds = array<i64: 1>, scalar_prefetch = 0 : i64, scratch_operands = 0 : i64, tpu.core_type = #tpu.core_type<tc>, window_params = [{transform_indices = @transform_0, window_bounds = array<i64: 8, 128>}, {transform_indices = @transform_1, window_bounds = array<i64: 8, 1>}, {transform_indices = @transform_2, window_bounds = array<i64: 8, 128>}, {pipeline_mode = #tpu.pipeline_mode<synchronous>, transform_indices = @transform_3, window_bounds = array<i64: 4, 128, 128>}, {transform_indices = @transform_4, window_bounds = array<i64: 1, 1, 128>}]} {
    %c0 = arith.constant 0 : index
    %c0_0 = arith.constant 0 : index
    %0 = vector.load %arg1[%c0, %c0_0] : memref<8x128xf32, #tpu.memory_space<vmem>>, vector<8x128xf32>
    %c0_1 = arith.constant 0 : index
    %c0_2 = arith.constant 0 : index
    %1 = vector.load %arg2[%c0_1, %c0_2] : memref<8x1xi32, #tpu.memory_space<vmem>>, vector<8x1xi32>
    %c0_3 = arith.constant 0 : index
    %c0_4 = arith.constant 0 : index
    %2 = vector.load %arg3[%c0_3, %c0_4] : memref<8x128xf32, #tpu.memory_space<vmem>>, vector<8x128xf32>
    %3 = tpu.iota {dimensions = array<i32: 1>} : vector<8x128xi32>
    %4 = vector.broadcast %1 : vector<8x1xi32> to vector<8x128xi32>
    %5 = arith.cmpi eq, %3, %4 : vector<8x128xi32>
    %6 = arith.extui %5 : vector<8x128xi1> to vector<8x128xi32>
    %7 = arith.sitofp %6 : vector<8x128xi32> to vector<8x128xf32>
    %8 = arith.mulf %2, %2 : vector<8x128xf32>
    %cst = arith.constant dense<0.000000e+00> : vector<8xf32>
    %9 = vector.multi_reduction <add>, %8, %cst [1] : vector<8x128xf32> to vector<8xf32>
    %10 = vector.shape_cast %9 : vector<8xf32> to vector<8x1xf32>
    %11 = math.sqrt %10 : vector<8x1xf32>
    %cst_5 = arith.constant 9.99999993E-9 : f32
    %12 = vector.broadcast %cst_5 : f32 to vector<8x1xf32>
    %13 = arith.addf %11, %12 : vector<8x1xf32>
    %cst_6 = arith.constant 1.000000e+00 : f32
    %14 = vector.broadcast %cst_6 : f32 to vector<8x1xf32>
    %15 = arith.divf %14, %13 : vector<8x1xf32>
    %16 = vector.broadcast %15 : vector<8x1xf32> to vector<8x128xf32>
    %17 = arith.mulf %2, %16 : vector<8x128xf32>
    %18 = arith.truncf %17 : vector<8x128xf32> to vector<8x128xbf16>
    %c0_7 = arith.constant 0 : index
    %c0_8 = arith.constant 0 : index
    %c0_9 = arith.constant 0 : index
    %19 = vector.load %arg4[%c0_7, %c0_8, %c0_9] : memref<4x128x128xbf16, #tpu.memory_space<vmem>>, vector<1x128x128xbf16>
    %20 = vector.shape_cast %19 : vector<1x128x128xbf16> to vector<128x128xbf16>
    %cst_10 = arith.constant dense<0.000000e+00> : vector<8x128xf32>
    %21 = tpu.matmul %18, %20, %cst_10 {dimension_numbers = #tpu.dot_dimension_numbers<[1], [0], [0], [1], [0, 0, 1, 1], [], []>} : vector<8x128xbf16>, vector<128x128xbf16>, vector<8x128xf32> -> vector<8x128xf32>
    %c1 = arith.constant 1 : index
    %c0_11 = arith.constant 0 : index
    %c0_12 = arith.constant 0 : index
    %22 = vector.load %arg4[%c1, %c0_11, %c0_12] : memref<4x128x128xbf16, #tpu.memory_space<vmem>>, vector<1x128x128xbf16>
    %23 = vector.shape_cast %22 : vector<1x128x128xbf16> to vector<128x128xbf16>
    %cst_13 = arith.constant dense<0.000000e+00> : vector<8x128xf32>
    %24 = tpu.matmul %18, %23, %cst_13 {dimension_numbers = #tpu.dot_dimension_numbers<[1], [0], [0], [1], [0, 0, 1, 1], [], []>} : vector<8x128xbf16>, vector<128x128xbf16>, vector<8x128xf32> -> vector<8x128xf32>
    %25 = arith.maximumf %21, %24 : vector<8x128xf32>
    %c2 = arith.constant 2 : index
    %c0_14 = arith.constant 0 : index
    %c0_15 = arith.constant 0 : index
    %26 = vector.load %arg4[%c2, %c0_14, %c0_15] : memref<4x128x128xbf16, #tpu.memory_space<vmem>>, vector<1x128x128xbf16>
    %27 = vector.shape_cast %26 : vector<1x128x128xbf16> to vector<128x128xbf16>
    %cst_16 = arith.constant dense<0.000000e+00> : vector<8x128xf32>
    %28 = tpu.matmul %18, %27, %cst_16 {dimension_numbers = #tpu.dot_dimension_numbers<[1], [0], [0], [1], [0, 0, 1, 1], [], []>} : vector<8x128xbf16>, vector<128x128xbf16>, vector<8x128xf32> -> vector<8x128xf32>
    %29 = arith.maximumf %25, %28 : vector<8x128xf32>
    %c3 = arith.constant 3 : index
    %c0_17 = arith.constant 0 : index
    %c0_18 = arith.constant 0 : index
    %30 = vector.load %arg4[%c3, %c0_17, %c0_18] : memref<4x128x128xbf16, #tpu.memory_space<vmem>>, vector<1x128x128xbf16>
    %31 = vector.shape_cast %30 : vector<1x128x128xbf16> to vector<128x128xbf16>
    %cst_19 = arith.constant dense<0.000000e+00> : vector<8x128xf32>
    %32 = tpu.matmul %18, %31, %cst_19 {dimension_numbers = #tpu.dot_dimension_numbers<[1], [0], [0], [1], [0, 0, 1, 1], [], []>} : vector<8x128xbf16>, vector<128x128xbf16>, vector<8x128xf32> -> vector<8x128xf32>
    %33 = arith.maximumf %29, %32 : vector<8x128xf32>
    %34 = math.absf %33 : vector<8x128xf32>
    %cst_20 = arith.constant dense<0xFF800000> : vector<8xf32>
    %35 = vector.multi_reduction <maximumf>, %0, %cst_20 [1] : vector<8x128xf32> to vector<8xf32>
    %36 = vector.shape_cast %35 : vector<8xf32> to vector<8x1xf32>
    %37 = vector.broadcast %36 : vector<8x1xf32> to vector<8x128xf32>
    %38 = arith.subf %0, %37 : vector<8x128xf32>
    %39 = math.exp %38 : vector<8x128xf32>
    %cst_21 = arith.constant dense<0.000000e+00> : vector<8xf32>
    %40 = vector.multi_reduction <add>, %39, %cst_21 [1] : vector<8x128xf32> to vector<8xf32>
    %41 = vector.shape_cast %40 : vector<8xf32> to vector<8x1xf32>
    %42 = math.log %41 : vector<8x1xf32>
    %43 = arith.addf %36, %42 : vector<8x1xf32>
    %44 = vector.broadcast %43 : vector<8x1xf32> to vector<8x128xf32>
    %45 = arith.subf %0, %44 : vector<8x128xf32>
    %46 = arith.mulf %7, %45 : vector<8x128xf32>
    %cst_22 = arith.constant dense<0.000000e+00> : vector<8xf32>
    %47 = vector.multi_reduction <add>, %46, %cst_22 [1] : vector<8x128xf32> to vector<8xf32>
    %48 = vector.shape_cast %47 : vector<8xf32> to vector<8x1xf32>
    %cst_23 = arith.constant 0.000000e+00 : f32
    %49 = vector.broadcast %cst_23 : f32 to vector<8x1xf32>
    %50 = arith.subf %49, %48 : vector<8x1xf32>
    %51 = arith.mulf %34, %45 : vector<8x128xf32>
    %cst_24 = arith.constant dense<0.000000e+00> : vector<8xf32>
    %52 = vector.multi_reduction <add>, %51, %cst_24 [1] : vector<8x128xf32> to vector<8xf32>
    %53 = vector.shape_cast %52 : vector<8xf32> to vector<8x1xf32>
    %cst_25 = arith.constant 0.000000e+00 : f32
    %54 = vector.broadcast %cst_25 : f32 to vector<8x1xf32>
    %55 = arith.subf %54, %53 : vector<8x1xf32>
    %cst_26 = arith.constant 1.000000e+00 : f32
    %56 = vector.broadcast %cst_26 : f32 to vector<8x128xf32>
    %57 = arith.subf %56, %7 : vector<8x128xf32>
    %58 = arith.mulf %34, %57 : vector<8x128xf32>
    %cst_27 = arith.constant dense<0xFF800000> : vector<8xf32>
    %59 = vector.multi_reduction <maximumf>, %58, %cst_27 [1] : vector<8x128xf32> to vector<8xf32>
    %60 = vector.shape_cast %59 : vector<8xf32> to vector<8x1xf32>
    %cst_28 = arith.constant 0.00999999977 : f32
    %61 = vector.broadcast %cst_28 : f32 to vector<8x1xf32>
    %62 = arith.subf %60, %61 : vector<8x1xf32>
    %cst_29 = arith.constant 0.000000e+00 : f32
    %63 = vector.broadcast %cst_29 : f32 to vector<8x1xf32>
    %64 = arith.maximumf %62, %63 : vector<8x1xf32>
    %cst_30 = arith.constant 1.000000e+00 : f32
    %65 = vector.broadcast %cst_30 : f32 to vector<8x1xf32>
    %66 = arith.addf %64, %65 : vector<8x1xf32>
    %cst_31 = arith.constant 1.000000e+00 : f32
    %67 = vector.broadcast %cst_31 : f32 to vector<8x1xf32>
    %68 = arith.divf %67, %66 : vector<8x1xf32>
    %cst_32 = arith.constant 1.000000e+00 : f32
    %69 = vector.broadcast %cst_32 : f32 to vector<8x1xf32>
    %70 = arith.subf %69, %68 : vector<8x1xf32>
    %cst_33 = arith.constant 2.000000e+00 : f32
    %71 = vector.broadcast %cst_33 : f32 to vector<8x1xf32>
    %72 = arith.mulf %71, %70 : vector<8x1xf32>
    %cst_34 = arith.constant 1.000000e+00 : f32
    %73 = vector.broadcast %cst_34 : f32 to vector<8x1xf32>
    %74 = arith.minimumf %72, %73 : vector<8x1xf32>
    %cst_35 = arith.constant dense<0.000000e+00> : vector<1xf32>
    %75 = vector.multi_reduction <add>, %50, %cst_35 [0] : vector<8x1xf32> to vector<1xf32>
    %76 = vector.shape_cast %75 : vector<1xf32> to vector<1x1xf32>
    %cst_36 = arith.constant dense<0.000000e+00> : vector<1xf32>
    %77 = vector.multi_reduction <add>, %55, %cst_36 [0] : vector<8x1xf32> to vector<1xf32>
    %78 = vector.shape_cast %77 : vector<1xf32> to vector<1x1xf32>
    %cst_37 = arith.constant dense<0.000000e+00> : vector<1xf32>
    %79 = vector.multi_reduction <add>, %74, %cst_37 [0] : vector<8x1xf32> to vector<1xf32>
    %80 = vector.shape_cast %79 : vector<1xf32> to vector<1x1xf32>
    %81 = tpu.iota {dimensions = array<i32: 1>} : vector<1x128xi32>
    %c0_i32 = arith.constant 0 : i32
    %82 = vector.broadcast %c0_i32 : i32 to vector<1x128xi32>
    %83 = arith.cmpi eq, %81, %82 : vector<1x128xi32>
    %cst_38 = arith.constant 0.000000e+00 : f32
    %84 = vector.shape_cast %76 : vector<1x1xf32> to vector<1x1xf32>
    %85 = vector.broadcast %84 : vector<1x1xf32> to vector<1x128xf32>
    %86 = vector.broadcast %cst_38 : f32 to vector<1x128xf32>
    %87 = arith.select %83, %85, %86 : vector<1x128xi1>, vector<1x128xf32>
    %c1_i32 = arith.constant 1 : i32
    %88 = vector.broadcast %c1_i32 : i32 to vector<1x128xi32>
    %89 = arith.cmpi eq, %81, %88 : vector<1x128xi32>
    %90 = vector.shape_cast %78 : vector<1x1xf32> to vector<1x1xf32>
    %91 = vector.broadcast %90 : vector<1x1xf32> to vector<1x128xf32>
    %92 = arith.select %89, %91, %87 : vector<1x128xi1>, vector<1x128xf32>
    %c2_i32 = arith.constant 2 : i32
    %93 = vector.broadcast %c2_i32 : i32 to vector<1x128xi32>
    %94 = arith.cmpi eq, %81, %93 : vector<1x128xi32>
    %95 = vector.shape_cast %80 : vector<1x1xf32> to vector<1x1xf32>
    %96 = vector.broadcast %95 : vector<1x1xf32> to vector<1x128xf32>
    %97 = arith.select %94, %96, %92 : vector<1x128xi1>, vector<1x128xf32>
    %98 = vector.shape_cast %97 : vector<1x128xf32> to vector<1x1x128xf32>
    %c0_39 = arith.constant 0 : index
    %c0_40 = arith.constant 0 : index
    %c0_41 = arith.constant 0 : index
    %99 = vector.load %arg5[%c0_39, %c0_40, %c0_41] : memref<1x1x128xf32, #tpu.memory_space<vmem>>, vector<1x1x128xf32>
    tpu.vector_store %arg5[%c0_39, %c0_40, %c0_41], %98 {strides = array<i32>} : memref<1x1x128xf32, #tpu.memory_space<vmem>>, vector<1x1x128xf32>,
    return
  }
  func.func @transform_0(%arg0: i32) -> (i32, i32) {
    %c0_i32 = arith.constant 0 : i32
    %c0_i32_0 = arith.constant 0 : i32
    return %arg0, %c0_i32 : i32, i32
  }
  func.func @transform_1(%arg0: i32) -> (i32, i32) {
    %c0_i32 = arith.constant 0 : i32
    %c0_i32_0 = arith.constant 0 : i32
    return %arg0, %c0_i32 : i32, i32
  }
  func.func @transform_2(%arg0: i32) -> (i32, i32) {
    %c0_i32 = arith.constant 0 : i32
    %c0_i32_0 = arith.constant 0 : i32
    return %arg0, %c0_i32 : i32, i32
  }
  func.func @transform_3(%arg0: i32) -> (i32, i32, i32) {
    %c0_i32 = arith.constant 0 : i32
    %c0_i32_0 = arith.constant 0 : i32
    %c0_i32_1 = arith.constant 0 : i32
    %c0_i32_2 = arith.constant 0 : i32
    return %c0_i32, %c0_i32_0, %c0_i32_1 : i32, i32, i32
  }
  func.func @transform_4(%arg0: i32) -> (i32, i32, i32) {
    %c0_i32 = arith.constant 0 : i32
    %c0_i32_0 = arith.constant 0 : i32
    %c0_i32_1 = arith.constant 0 : i32
    return %arg0, %c0_i32, %c0_i32_0 : i32, i32, i32
  }
}

</mosaic_0001>

<llo_original>
// kernel: tpu_custom_call.1
$region0: #{tpu_custom_call.1}
  #allocation0 [shape = 'u32[]', space=smem, size = 0x4, offset = 0x4, fixed_abs, tag = 'smem constant byte address 0x4 - core index']
  #allocation1 [shape = 'u32[144,128]{1,0:T(1,128)}', space=vmem, size = 0x12000, scoped, tag = 'internal scratch']
  %s0 = inlined_call_operand.vmem [shape: f32[8,128], index: 0, kind: input, shape index: {}]
  %s1 = inlined_call_operand.vmem [shape: s32[8,1], index: 1, kind: input, shape index: {}]
  %s2 = inlined_call_operand.vmem [shape: f32[8,128], index: 2, kind: input, shape index: {}]
  %s3 = inlined_call_operand.hbm [shape: bf16[4,128,128], index: 3, kind: input, shape index: {}]
  %s4 = inlined_call_operand.hbm [shape: f32[1,1,128], index: 4, kind: output, shape index: {}]
  %s5 = sld [smem:[#allocation0]]
  $region30: #{tpu_custom_call.1} parent=0
    _
  %s7 = ssub.s32 1, %s5
  %s8 = scalar_select 0, %s7, %s5
  $region1: #{tpu_custom_call.1} parent=0
    #allocation2 [shape = 'u8[131072]{0}', space=vmem, size = 0x20000, scoped, tag = 'input window, operand 3, single buffered']
    #allocation3 [shape = 's32[1]{0}', space=sflag, size = 0x4, scoped, tag = 'scoped memory for tpu_custom_call.1']
    #allocation4 [shape = 's32[1]{0}', space=sflag, size = 0x4, scoped, tag = 'scoped memory for tpu_custom_call.1']
    #allocation5 [shape = 'u8[512]{0}', space=vmem, size = 0x400, scoped, tag = 'output window, operand 0, single buffered']
    %9 = vsyncpa [#allocation3], 0
    %10 = vsyncpa [#allocation4], 0
    // Predicated region
    $region2: #{tpu_custom_call.1} parent=1 // pred_check
      _
    $region3: #{tpu_custom_call.1} parent=1 // pred_check_branch
      %12 = sbr.rel (0) target = $region5
    $region4: #{tpu_custom_call.1} parent=1 // pred_region
      _
    $region5: #{tpu_custom_call.1} parent=1 // pred_fallthru
      _
    // Predicated region
    $region6: #{tpu_custom_call.1} parent=1 // pred_check
      _
    $region7: #{tpu_custom_call.1} parent=1 // pred_check_branch
      %14 = sbr.rel (0) target = $region9
    $region8: #{tpu_custom_call.1} parent=1 // pred_region
      _
    $region9: #{tpu_custom_call.1} parent=1 // pred_fallthru
      _
    // Predicated region
    $region10: #{tpu_custom_call.1} parent=1 // pred_check
      _
    $region11: #{tpu_custom_call.1} parent=1 // pred_check_branch
      %16 = sbr.rel (0) target = $region13
    $region12: #{tpu_custom_call.1} parent=1 // pred_region
      _
    $region13: #{tpu_custom_call.1} parent=1 // pred_fallthru
      _
    // Predicated region
    $region14: #{tpu_custom_call.1} parent=1 // pred_check
      _
    $region15: #{tpu_custom_call.1} parent=1 // pred_check_branch
      %18 = sbr.rel (0) target = $region17
    $region16: #{tpu_custom_call.1} parent=1 // pred_region
      %s20 = ssub.s32 4096, 4096
      %21 = vsyncadd [#allocation3], %s20
      %s22 = sshll.u32 [#allocation2], 4
      %s23 = int_to_ptr.vmem [resolvable:$true] %s22
      %28 = dma.hbm_to_vmem [thread:$0]  %s3, 4096, %s23, [#allocation3], 64, 64, 4
    $region17: #{tpu_custom_call.1} parent=1 // pred_fallthru
      _
    // Predicated region
    $region18: #{tpu_custom_call.1} parent=1 // pred_check
      _
    $region19: #{tpu_custom_call.1} parent=1 // pred_check_branch
      %30 = sbr.rel (0) target = $region21
    $region20: #{tpu_custom_call.1} parent=1 // pred_region
      %31 = dma.done [#allocation3], 4096
    $region21: #{tpu_custom_call.1} parent=1 // pred_fallthru
      _
    %v33 = vld [vmem:[%s0] sm:$0xff]
    %v34 = vld [vmem:[%s1] sm:$0xff]
    %v35 = vld [vmem:[%s2] sm:$0xff]
    %v36 = vlaneseq
    %v37 = vand.u32 %v36, 127
    %38 = vset.pattern.permute.xlu0 0
    %39 = vperm.xlu0 %38, %v34
    %v40 = vpop.permute.xlu0 %39
    %vm41 = vcmp.eq.s32.totalorder %v37, %v40
    %v42 = vsel %vm41, 1, 0
    %v43 = vcvt.s32.f32 %v42
    %v44 = vmul.f32 %v35, %v35
    %45 = vadd.xlane.f32.xlu0 %v44
    %v46 = vpop.xlane.xlu0 %45
    %v47 = vrsqrt.pop %v46
    %v48 = vmul.f32 %v46, %v47
    %vm49 = vcmp.eq.f32.partialorder %v46, inf
    %v50 = vsel %vm49, %v46, %v48
    %vm51 = vcmp.eq.f32.partialorder %v46, 0.0
    %v52 = vand.u32 %v46, 2147483648
    %v53 = vsel %vm51, %v52, %v50
    %v54 = vadd.f32 %v53, 1e-08
    %v55 = vrcp.pop %v54
    %v56 = vmul.f32 1.0, %v55
    %v57 = vmul.f32 %v35, %v56
    %v58 = vpack.c.bf16 %v57, %v57
    %v59 = vld [vmem:[#allocation2] sm:$0xf]
    %v60 = vld [vmem:[#allocation2 + $0x4] sm:$0xf]
    %v61 = vld [vmem:[#allocation2 + $0x8] sm:$0xf]
    %v62 = vld [vmem:[#allocation2 + $0xc] sm:$0xf]
    %v63 = vld [vmem:[#allocation2 + $0x10] sm:$0xf]
    %v64 = vld [vmem:[#allocation2 + $0x14] sm:$0xf]
    %v65 = vld [vmem:[#allocation2 + $0x18] sm:$0xf]
    %v66 = vld [vmem:[#allocation2 + $0x1c] sm:$0xf]
    %v67 = vld [vmem:[#allocation2 + $0x20] sm:$0xf]
    %v68 = vld [vmem:[#allocation2 + $0x24] sm:$0xf]
    %v69 = vld [vmem:[#allocation2 + $0x28] sm:$0xf]
    %v70 = vld [vmem:[#allocation2 + $0x2c] sm:$0xf]
    %v71 = vld [vmem:[#allocation2 + $0x30] sm:$0xf]
    %v72 = vld [vmem:[#allocation2 + $0x34] sm:$0xf]
    %v73 = vld [vmem:[#allocation2 + $0x38] sm:$0xf]
    %v74 = vld [vmem:[#allocation2 + $0x3c] sm:$0xf]
    %v91 = vunpack.c.l.b16 %v59
    %v92 = vunpack.c.l.b16 %v60
    %v93 = vunpack.c.l.b16 %v61
    %v94 = vunpack.c.l.b16 %v62
    %v95 = vunpack.c.l.b16 %v63
    %v96 = vunpack.c.l.b16 %v64
    %v97 = vunpack.c.l.b16 %v65
    %v98 = vunpack.c.l.b16 %v66
    %v99 = vunpack.c.l.b16 %v67
    %v100 = vunpack.c.l.b16 %v68
    %v101 = vunpack.c.l.b16 %v69
    %v102 = vunpack.c.l.b16 %v70
    %v103 = vunpack.c.l.b16 %v71
    %v104 = vunpack.c.l.b16 %v72
    %v105 = vunpack.c.l.b16 %v73
    %v106 = vunpack.c.l.b16 %v74
    %v107 = vpack.c.b16 %v92, %v91
    %v108 = vpack.c.b16 %v94, %v93
    %v109 = vpack.c.b16 %v96, %v95
    %v110 = vpack.c.b16 %v98, %v97
    %v111 = vpack.c.b16 %v100, %v99
    %v112 = vpack.c.b16 %v102, %v101
    %v113 = vpack.c.b16 %v104, %v103
    %v114 = vpack.c.b16 %v106, %v105
    %123 = vmatprep.subr.bf16.mxu0 0
    %124 = vmatpush1.bf16.msra.mxu0 %v107
    %125 = vmatprep.subr.bf16.mxu0 0
    %126 = vmatpush1.bf16.msra.mxu0 %v108
    %127 = vmatprep.subr.bf16.mxu0 0
    %128 = vmatpush1.bf16.msra.mxu0 %v109
    %129 = vmatprep.subr.bf16.mxu0 0
    %130 = vmatpush1.bf16.msra.mxu0 %v110
    %131 = vmatprep.subr.bf16.mxu0 0
    %132 = vmatpush1.bf16.msra.mxu0 %v111
    %133 = vmatprep.subr.bf16.mxu0 0
    %134 = vmatpush1.bf16.msra.mxu0 %v112
    %135 = vmatprep.subr.bf16.mxu0 0
    %136 = vmatpush1.bf16.msra.mxu0 %v113
    %137 = vmatprep.subr.bf16.mxu0 0
    %138 = vmatpush1.bf16.msra.mxu0 %v114
    %139 = vmatprep.subr.bf16.mxu0 0
    %140 = vmatpush1.bf16.msra.mxu0 0
    %141 = vmatprep.subr.bf16.mxu0 0
    %142 = vmatpush1.bf16.msra.mxu0 0
    %143 = vmatprep.subr.bf16.mxu0 0
    %144 = vmatpush1.bf16.msra.mxu0 0
    %145 = vmatprep.subr.bf16.mxu0 0
    %146 = vmatpush1.bf16.msra.mxu0 0
    %147 = vmatprep.subr.bf16.mxu0 0
    %148 = vmatpush1.bf16.msra.mxu0 0
    %149 = vmatprep.subr.bf16.mxu0 0
    %150 = vmatpush1.bf16.msra.mxu0 0
    %151 = vmatprep.subr.bf16.mxu0 0
    %152 = vmatpush1.bf16.msra.mxu0 0
    %153 = vmatprep.subr.bf16.mxu0 0
    %154 = vmatpush1.bf16.msra.mxu0 0
    %155 = vmatprep.mubr.bf16.mxu0 0
    %156 = vmatmul.mubr.bf16.gmra.mrb[0].mxu0 %v58
    %v157 = vpop.f32.mrb[0].mxu0
    %v158 = vadd.f32 0.0, %v157
    %v159 = vpop.f32.mrb[0].mxu0
    %v160 = vpop.f32.mrb[0].mxu0
    %v161 = vpop.f32.mrb[0].mxu0
    %162 = vdwg.mxu0
    %s163 = scalar_lea.vmem [#allocation2], 64
    %v164 = vld [vmem:[%s163] sm:$0xf]
    %v165 = vld [vmem:[%s163 + $0x4] sm:$0xf]
    %v166 = vld [vmem:[%s163 + $0x8] sm:$0xf]
    %v167 = vld [vmem:[%s163 + $0xc] sm:$0xf]
    %v168 = vld [vmem:[%s163 + $0x10] sm:$0xf]
    %v169 = vld [vmem:[%s163 + $0x14] sm:$0xf]
    %v170 = vld [vmem:[%s163 + $0x18] sm:$0xf]
    %v171 = vld [vmem:[%s163 + $0x1c] sm:$0xf]
    %v172 = vld [vmem:[%s163 + $0x20] sm:$0xf]
    %v173 = vld [vmem:[%s163 + $0x24] sm:$0xf]
    %v174 = vld [vmem:[%s163 + $0x28] sm:$0xf]
    %v175 = vld [vmem:[%s163 + $0x2c] sm:$0xf]
    %v176 = vld [vmem:[%s163 + $0x30] sm:$0xf]
    %v177 = vld [vmem:[%s163 + $0x34] sm:$0xf]
    %v178 = vld [vmem:[%s163 + $0x38] sm:$0xf]
    %v179 = vld [vmem:[%s163 + $0x3c] sm:$0xf]
    %v196 = vunpack.c.l.b16 %v164
    %v197 = vunpack.c.l.b16 %v165
    %v198 = vunpack.c.l.b16 %v166
    %v199 = vunpack.c.l.b16 %v167
    %v200 = vunpack.c.l.b16 %v168
    %v201 = vunpack.c.l.b16 %v169
    %v202 = vunpack.c.l.b16 %v170
    %v203 = vunpack.c.l.b16 %v171
    %v204 = vunpack.c.l.b16 %v172
    %v205 = vunpack.c.l.b16 %v173
    %v206 = vunpack.c.l.b16 %v174
    %v207 = vunpack.c.l.b16 %v175
    %v208 = vunpack.c.l.b16 %v176
    %v209 = vunpack.c.l.b16 %v177
    %v210 = vunpack.c.l.b16 %v178
    %v211 = vunpack.c.l.b16 %v179
    %v212 = vpack.c.b16 %v197, %v196
    %v213 = vpack.c.b16 %v199, %v198
    %v214 = vpack.c.b16 %v201, %v200
    %v215 = vpack.c.b16 %v203, %v202
    %v216 = vpack.c.b16 %v205, %v204
    %v217 = vpack.c.b16 %v207, %v206
    %v218 = vpack.c.b16 %v209, %v208
    %v219 = vpack.c.b16 %v211, %v210
    %228 = vmatprep.subr.bf16.mxu0 0
    %229 = vmatpush1.bf16.msra.mxu0 %v212
    %230 = vmatprep.subr.bf16.mxu0 0
    %231 = vmatpush1.bf16.msra.mxu0 %v213
    %232 = vmatprep.subr.bf16.mxu0 0
    %233 = vmatpush1.bf16.msra.mxu0 %v214
    %234 = vmatprep.subr.bf16.mxu0 0
    %235 = vmatpush1.bf16.msra.mxu0 %v215
    %236 = vmatprep.subr.bf16.mxu0 0
    %237 = vmatpush1.bf16.msra.mxu0 %v216
    %238 = vmatprep.subr.bf16.mxu0 0
    %239 = vmatpush1.bf16.msra.mxu0 %v217
    %240 = vmatprep.subr.bf16.mxu0 0
    %241 = vmatpush1.bf16.msra.mxu0 %v218
    %242 = vmatprep.subr.bf16.mxu0 0
    %243 = vmatpush1.bf16.msra.mxu0 %v219
    %244 = vmatprep.subr.bf16.mxu0 0
    %245 = vmatpush1.bf16.msra.mxu0 0
    %246 = vmatprep.subr.bf16.mxu0 0
    %247 = vmatpush1.bf16.msra.mxu0 0
    %248 = vmatprep.subr.bf16.mxu0 0
    %249 = vmatpush1.bf16.msra.mxu0 0
    %250 = vmatprep.subr.bf16.mxu0 0
    %251 = vmatpush1.bf16.msra.mxu0 0
    %252 = vmatprep.subr.bf16.mxu0 0
    %253 = vmatpush1.bf16.msra.mxu0 0
    %254 = vmatprep.subr.bf16.mxu0 0
    %255 = vmatpush1.bf16.msra.mxu0 0
    %256 = vmatprep.subr.bf16.mxu0 0
    %257 = vmatpush1.bf16.msra.mxu0 0
    %258 = vmatprep.subr.bf16.mxu0 0
    %259 = vmatpush1.bf16.msra.mxu0 0
    %260 = vmatprep.mubr.bf16.mxu0 0
    %261 = vmatmul.mubr.bf16.gmra.mrb[0].mxu0 %v58
    %v262 = vpop.f32.mrb[0].mxu0
    %v263 = vadd.f32 0.0, %v262
    %v264 = vpop.f32.mrb[0].mxu0
    %v265 = vpop.f32.mrb[0].mxu0
    %v266 = vpop.f32.mrb[0].mxu0
    %267 = vdwg.mxu0
    %v268 = vmax.f32 %v158, %v263
    %s269 = scalar_lea.vmem [#allocation2], 128
    %v270 = vld [vmem:[%s269] sm:$0xf]
    %v271 = vld [vmem:[%s269 + $0x4] sm:$0xf]
    %v272 = vld [vmem:[%s269 + $0x8] sm:$0xf]
    %v273 = vld [vmem:[%s269 + $0xc] sm:$0xf]
    %v274 = vld [vmem:[%s269 + $0x10] sm:$0xf]
    %v275 = vld [vmem:[%s269 + $0x14] sm:$0xf]
    %v276 = vld [vmem:[%s269 + $0x18] sm:$0xf]
    %v277 = vld [vmem:[%s269 + $0x1c] sm:$0xf]
    %v278 = vld [vmem:[%s269 + $0x20] sm:$0xf]
    %v279 = vld [vmem:[%s269 + $0x24] sm:$0xf]
    %v280 = vld [vmem:[%s269 + $0x28] sm:$0xf]
    %v281 = vld [vmem:[%s269 + $0x2c] sm:$0xf]
    %v282 = vld [vmem:[%s269 + $0x30] sm:$0xf]
    %v283 = vld [vmem:[%s269 + $0x34] sm:$0xf]
    %v284 = vld [vmem:[%s269 + $0x38] sm:$0xf]
    %v285 = vld [vmem:[%s269 + $0x3c] sm:$0xf]
    %v302 = vunpack.c.l.b16 %v270
    %v303 = vunpack.c.l.b16 %v271
    %v304 = vunpack.c.l.b16 %v272
    %v305 = vunpack.c.l.b16 %v273
    %v306 = vunpack.c.l.b16 %v274
    %v307 = vunpack.c.l.b16 %v275
    %v308 = vunpack.c.l.b16 %v276
    %v309 = vunpack.c.l.b16 %v277
    %v310 = vunpack.c.l.b16 %v278
    %v311 = vunpack.c.l.b16 %v279
    %v312 = vunpack.c.l.b16 %v280
    %v313 = vunpack.c.l.b16 %v281
    %v314 = vunpack.c.l.b16 %v282
    %v315 = vunpack.c.l.b16 %v283
    %v316 = vunpack.c.l.b16 %v284
    %v317 = vunpack.c.l.b16 %v285
    %v318 = vpack.c.b16 %v303, %v302
    %v319 = vpack.c.b16 %v305, %v304
    %v320 = vpack.c.b16 %v307, %v306
    %v321 = vpack.c.b16 %v309, %v308
    %v322 = vpack.c.b16 %v311, %v310
    %v323 = vpack.c.b16 %v313, %v312
    %v324 = vpack.c.b16 %v315, %v314
    %v325 = vpack.c.b16 %v317, %v316
    %334 = vmatprep.subr.bf16.mxu0 0
    %335 = vmatpush1.bf16.msra.mxu0 %v318
    %336 = vmatprep.subr.bf16.mxu0 0
    %337 = vmatpush1.bf16.msra.mxu0 %v319
    %338 = vmatprep.subr.bf16.mxu0 0
    %339 = vmatpush1.bf16.msra.mxu0 %v320
    %340 = vmatprep.subr.bf16.mxu0 0
    %341 = vmatpush1.bf16.msra.mxu0 %v321
    %342 = vmatprep.subr.bf16.mxu0 0
    %343 = vmatpush1.bf16.msra.mxu0 %v322
    %344 = vmatprep.subr.bf16.mxu0 0
    %345 = vmatpush1.bf16.msra.mxu0 %v323
    %346 = vmatprep.subr.bf16.mxu0 0
    %347 = vmatpush1.bf16.msra.mxu0 %v324
    %348 = vmatprep.subr.bf16.mxu0 0
    %349 = vmatpush1.bf16.msra.mxu0 %v325
    %350 = vmatprep.subr.bf16.mxu0 0
    %351 = vmatpush1.bf16.msra.mxu0 0
    %352 = vmatprep.subr.bf16.mxu0 0
    %353 = vmatpush1.bf16.msra.mxu0 0
    %354 = vmatprep.subr.bf16.mxu0 0
    %355 = vmatpush1.bf16.msra.mxu0 0
    %356 = vmatprep.subr.bf16.mxu0 0
    %357 = vmatpush1.bf16.msra.mxu0 0
    %358 = vmatprep.subr.bf16.mxu0 0
    %359 = vmatpush1.bf16.msra.mxu0 0
    %360 = vmatprep.subr.bf16.mxu0 0
    %361 = vmatpush1.bf16.msra.mxu0 0
    %362 = vmatprep.subr.bf16.mxu0 0
    %363 = vmatpush1.bf16.msra.mxu0 0
    %364 = vmatprep.subr.bf16.mxu0 0
    %365 = vmatpush1.bf16.msra.mxu0 0
    %366 = vmatprep.mubr.bf16.mxu0 0
    %367 = vmatmul.mubr.bf16.gmra.mrb[0].mxu0 %v58
    %v368 = vpop.f32.mrb[0].mxu0
    %v369 = vadd.f32 0.0, %v368
    %v370 = vpop.f32.mrb[0].mxu0
    %v371 = vpop.f32.mrb[0].mxu0
    %v372 = vpop.f32.mrb[0].mxu0
    %373 = vdwg.mxu0
    %v374 = vmax.f32 %v268, %v369
    %s375 = scalar_lea.vmem [#allocation2], 192
    %v376 = vld [vmem:[%s375] sm:$0xf]
    %v377 = vld [vmem:[%s375 + $0x4] sm:$0xf]
    %v378 = vld [vmem:[%s375 + $0x8] sm:$0xf]
    %v379 = vld [vmem:[%s375 + $0xc] sm:$0xf]
    %v380 = vld [vmem:[%s375 + $0x10] sm:$0xf]
    %v381 = vld [vmem:[%s375 + $0x14] sm:$0xf]
    %v382 = vld [vmem:[%s375 + $0x18] sm:$0xf]
    %v383 = vld [vmem:[%s375 + $0x1c] sm:$0xf]
    %v384 = vld [vmem:[%s375 + $0x20] sm:$0xf]
    %v385 = vld [vmem:[%s375 + $0x24] sm:$0xf]
    %v386 = vld [vmem:[%s375 + $0x28] sm:$0xf]
    %v387 = vld [vmem:[%s375 + $0x2c] sm:$0xf]
    %v388 = vld [vmem:[%s375 + $0x30] sm:$0xf]
    %v389 = vld [vmem:[%s375 + $0x34] sm:$0xf]
    %v390 = vld [vmem:[%s375 + $0x38] sm:$0xf]
    %v391 = vld [vmem:[%s375 + $0x3c] sm:$0xf]
    %v408 = vunpack.c.l.b16 %v376
    %v409 = vunpack.c.l.b16 %v377
    %v410 = vunpack.c.l.b16 %v378
    %v411 = vunpack.c.l.b16 %v379
    %v412 = vunpack.c.l.b16 %v380
    %v413 = vunpack.c.l.b16 %v381
    %v414 = vunpack.c.l.b16 %v382
    %v415 = vunpack.c.l.b16 %v383
    %v416 = vunpack.c.l.b16 %v384
    %v417 = vunpack.c.l.b16 %v385
    %v418 = vunpack.c.l.b16 %v386
    %v419 = vunpack.c.l.b16 %v387
    %v420 = vunpack.c.l.b16 %v388
    %v421 = vunpack.c.l.b16 %v389
    %v422 = vunpack.c.l.b16 %v390
    %v423 = vunpack.c.l.b16 %v391
    %v424 = vpack.c.b16 %v409, %v408
    %v425 = vpack.c.b16 %v411, %v410
    %v426 = vpack.c.b16 %v413, %v412
    %v427 = vpack.c.b16 %v415, %v414
    %v428 = vpack.c.b16 %v417, %v416
    %v429 = vpack.c.b16 %v419, %v418
    %v430 = vpack.c.b16 %v421, %v420
    %v431 = vpack.c.b16 %v423, %v422
    %440 = vmatprep.subr.bf16.mxu0 0
    %441 = vmatpush1.bf16.msra.mxu0 %v424
    %442 = vmatprep.subr.bf16.mxu0 0
    %443 = vmatpush1.bf16.msra.mxu0 %v425
    %444 = vmatprep.subr.bf16.mxu0 0
    %445 = vmatpush1.bf16.msra.mxu0 %v426
    %446 = vmatprep.subr.bf16.mxu0 0
    %447 = vmatpush1.bf16.msra.mxu0 %v427
    %448 = vmatprep.subr.bf16.mxu0 0
    %449 = vmatpush1.bf16.msra.mxu0 %v428
    %450 = vmatprep.subr.bf16.mxu0 0
    %451 = vmatpush1.bf16.msra.mxu0 %v429
    %452 = vmatprep.subr.bf16.mxu0 0
    %453 = vmatpush1.bf16.msra.mxu0 %v430
    %454 = vmatprep.subr.bf16.mxu0 0
    %455 = vmatpush1.bf16.msra.mxu0 %v431
    %456 = vmatprep.subr.bf16.mxu0 0
    %457 = vmatpush1.bf16.msra.mxu0 0
    %458 = vmatprep.subr.bf16.mxu0 0
    %459 = vmatpush1.bf16.msra.mxu0 0
    %460 = vmatprep.subr.bf16.mxu0 0
    %461 = vmatpush1.bf16.msra.mxu0 0
    %462 = vmatprep.subr.bf16.mxu0 0
    %463 = vmatpush1.bf16.msra.mxu0 0
    %464 = vmatprep.subr.bf16.mxu0 0
    %465 = vmatpush1.bf16.msra.mxu0 0
    %466 = vmatprep.subr.bf16.mxu0 0
    %467 = vmatpush1.bf16.msra.mxu0 0
    %468 = vmatprep.subr.bf16.mxu0 0
    %469 = vmatpush1.bf16.msra.mxu0 0
    %470 = vmatprep.subr.bf16.mxu0 0
    %471 = vmatpush1.bf16.msra.mxu0 0
    %472 = vmatprep.mubr.bf16.mxu0 0
    %473 = vmatmul.mubr.bf16.gmra.mrb[0].mxu0 %v58
    %v474 = vpop.f32.mrb[0].mxu0
    %v475 = vadd.f32 0.0, %v474
    %v476 = vpop.f32.mrb[0].mxu0
    %v477 = vpop.f32.mrb[0].mxu0
    %v478 = vpop.f32.mrb[0].mxu0
    %479 = vdwg.mxu0
    %v480 = vmax.f32 %v374, %v475
    %v481 = vand.u32 2147483647, %v480
    %482 = vmax.xlane.f32.xlu0 %v33
    %v483 = vpop.xlane.xlu0 %482
    %v484 = vsub.f32 %v33, %v483
    %v485 = vmul.f32 %v484, 1.442695
    %v486 = vpow.pop %v485
    %487 = vadd.xlane.f32.xlu0 %v486
    %v488 = vpop.xlane.xlu0 %487
    %v489 = vlog2.pop %v488
    %v490 = vmul.f32 %v489, 0.6931472
    %v491 = vadd.f32 %v483, %v490
    %v492 = vsub.f32 %v33, %v491
    %v493 = vmul.f32 %v43, %v492
    %494 = vadd.xlane.f32.xlu0 %v493
    %v495 = vpop.xlane.xlu0 %494
    %v496 = vsub.f32 0.0, %v495
    %v497 = vmul.f32 %v481, %v492
    %498 = vadd.xlane.f32.xlu0 %v497
    %v499 = vpop.xlane.xlu0 %498
    %v500 = vsub.f32 0.0, %v499
    %v501 = vsub.f32 1.0, %v43
    %v502 = vmul.f32 %v481, %v501
    %503 = vmax.xlane.f32.xlu0 %v502
    %v504 = vpop.xlane.xlu0 %503
    %v505 = vsub.f32 %v504, 0.01
    %v506 = vmax.f32 %v505, 0.0
    %v507 = vadd.f32 %v506, 1.0
    %v508 = vrcp.pop %v507
    %v509 = vmul.f32 1.0, %v508
    %v510 = vsub.f32 1.0, %v509
    %v511 = vmul.f32 %v510, 2.0
    %v512 = vmin.f32 %v511, 1.0
    %v513 = vrot.slane %v496, 4
    %v514 = vadd.f32 %v496, %v513
    %v515 = vrot.slane %v514, 2
    %v516 = vadd.f32 %v514, %v515
    %v517 = vrot.slane %v516, 1
    %v518 = vadd.f32 %v516, %v517
    %v519 = vrot.slane %v500, 4
    %v520 = vadd.f32 %v500, %v519
    %v521 = vrot.slane %v520, 2
    %v522 = vadd.f32 %v520, %v521
    %v523 = vrot.slane %v522, 1
    %v524 = vadd.f32 %v522, %v523
    %v525 = vrot.slane %v512, 4
    %v526 = vadd.f32 %v512, %v525
    %v527 = vrot.slane %v526, 2
    %v528 = vadd.f32 %v526, %v527
    %v529 = vrot.slane %v528, 1
    %v530 = vadd.f32 %v528, %v529
    %vm531 = vcmp.eq.s32.totalorder %v37, 0
    %v532 = vsel %vm531, %v518, 0.0
    %vm533 = vcmp.eq.s32.totalorder %v37, 1
    %v534 = vsel %vm533, %v524, %v532
    %vm535 = vcmp.eq.s32.totalorder %v37, 2
    %v536 = vsel %vm535, %v530, %v534
    %537 = vst [vmem:[#allocation5] sm:$0x1] %v536
    // Predicated region
    $region22: #{tpu_custom_call.1} parent=1 // pred_check
      _
    $region23: #{tpu_custom_call.1} parent=1 // pred_check_branch
      %539 = sbr.rel (0) target = $region25
    $region24: #{tpu_custom_call.1} parent=1 // pred_region
      %s541 = ssub.s32 16, 16
      %542 = vsyncadd [#allocation4], %s541
      %s544 = sshll.u32 [#allocation5], 4
      %s545 = int_to_ptr.vmem [resolvable:$true] %s544
      %547 = dma.vmem_to_hbm [thread:$0]  %s545, 16, %s4, [#allocation4]
    $region25: #{tpu_custom_call.1} parent=1 // pred_fallthru
      _
    // Predicated region
    $region26: #{tpu_custom_call.1} parent=1 // pred_check
      _
    $region27: #{tpu_custom_call.1} parent=1 // pred_check_branch
      %549 = sbr.rel (0) target = $region29
    $region28: #{tpu_custom_call.1} parent=1 // pred_region
      %550 = dma.done [#allocation4], 16
    $region29: #{tpu_custom_call.1} parent=1 // pred_fallthru
      _
    %551 = vsyncpa [#allocation3], 1
    %552 = vsyncpa [#allocation4], 1

</llo_original>
